<compile_context>
chip_gen: v6e
topology: v6e:2x2x1
jax: 0.10.0
libtpu: 0.0.40
codegen_flags: <defaults>
</compile_context>

<pallas_src>
import jax
import jax.numpy as jnp
from jax.experimental import pallas as pl
from jax.experimental.pallas import tpu as pltpu


def _round_up(x, m):
    return (x + m - 1) // m * m


def _patch_embed_kernel(p_ref, w_ref, b_ref, o_ref):
    # One full-K MXU matmul per M tile; f32 accumulation, bias folded into the
    # epilogue, single store of a lane-dense (tm, Dp) tile.
    acc = jnp.dot(p_ref[...], w_ref[...], preferred_element_type=jnp.float32)
    o_ref[...] = (acc + b_ref[...]).astype(o_ref.dtype)


def _extract_patches(x, tubelet_size, patch_size):
    """x: (B, C, T, H, W) -> (B, N, K) with K ordered (c, kt, kh, kw)."""
    B, C, T, H, W = x.shape
    tub, p = tubelet_size, patch_size
    Tp, Hp, Wp = T // tub, H // p, W // p
    x = x.reshape(B, C, Tp, tub, Hp, p, Wp, p)
    # -> (B, Tp, Hp, Wp, C, tub, p, p): patch index (t',h',w') row-major,
    # within-patch index (c, kt, kh, kw) matches Conv3d weight flattening.
    # The minor (lane) dim is unchanged, so this is a comparatively cheap
    # XLA transpose.
    # TODO(synk): fuse this transpose into the pallas input DMA
    # (allow_input_fusion / channels-last upstream layout) to avoid the extra
    # HBM round-trip of the input tensor.
    x = jnp.transpose(x, (0, 2, 4, 6, 1, 3, 5, 7))
    return x.reshape(B, Tp * Hp * Wp, C * tub * p * p)


def patch_embed(x, weight, bias, *, tubelet_size, patch_size,
                tm=256, compute_dtype=None):
    """
    x:      (B, C, T, H, W)
    weight: (embed_dim, C, tubelet_size, patch_size, patch_size)
    bias:   (embed_dim,)
    compute_dtype: optional operand dtype for the matmul (e.g. jnp.bfloat16 on
                   v6e/v7x); accumulation is always f32.
    returns (B, N, embed_dim) in x.dtype
    """
    B, C, T, H, W = x.shape
    D = weight.shape[0]
    tub, p = tubelet_size, patch_size
    assert T % tub == 0 and H % p == 0 and W % p == 0

    patches = _extract_patches(x, tub, p)            # (B, N, K)
    N, K = patches.shape[1], patches.shape[2]
    M = B * N
    patches_2d = patches.reshape(M, K)

    w_mat = jnp.transpose(weight.reshape(D, K))      # (K, D)
    b_mat = bias.reshape(1, D).astype(jnp.float32)   # bias added on f32 acc

    if compute_dtype is not None:
        patches_2d = patches_2d.astype(compute_dtype)
        w_mat = w_mat.astype(compute_dtype)

    # MXU-friendly M tile (multiple of 8, capped at the requested tm) and a
    # lane-dense (multiple-of-128) output/weight N dimension.
    tm_eff = min(tm, _round_up(M, 8))
    Mp = _round_up(M, tm_eff)
    Dp = _round_up(D, 128)

    if Mp != M:
        patches_2d = jnp.pad(patches_2d, ((0, Mp - M), (0, 0)))
    if Dp != D:
        w_mat = jnp.pad(w_mat, ((0, 0), (0, Dp - D)))
        b_mat = jnp.pad(b_mat, ((0, 0), (0, Dp - D)))

    out = pl.pallas_call(
        _patch_embed_kernel,
        out_shape=jax.ShapeDtypeStruct((Mp, Dp), x.dtype),
        grid_spec=pltpu.PrefetchScalarGridSpec(
            num_scalar_prefetch=0,
            grid=(Mp // tm_eff,),
            in_specs=[
                pl.BlockSpec((tm_eff, K), lambda i: (i, 0)),   # patches tile
                pl.BlockSpec((K, Dp), lambda i: (0, 0)),       # weight (resident)
                pl.BlockSpec((1, Dp), lambda i: (0, 0)),       # bias (resident)
            ],
            out_specs=pl.BlockSpec((tm_eff, Dp), lambda i: (i, 0)),
        ),
        compiler_params=pltpu.CompilerParams(
            dimension_semantics=("parallel",),
            vmem_limit_bytes=32 * 1024 * 1024,
        ),
    )(patches_2d, w_mat, b_mat)

    return out[:M, :D].reshape(B, N, D)


if __name__ == "__main__":
    # Small, module-consistent shapes:
    #   img_size=16, patch_size=8, in_chans=4, embed_dim=32,
    #   num_frames=4, tubelet_size=2  ->  N = (4//2)*(16//8)*(16//8) = 8
    B, C, T, H, W = 2, 4, 4, 16, 16
    patch_size, tubelet_size, embed_dim = 8, 2, 32

    key = jax.random.PRNGKey(0)
    kx, kw, kb = jax.random.split(key, 3)

    x = jax.random.normal(kx, (B, C, T, H, W), dtype=jnp.float32)
    weight = jax.random.normal(
        kw, (embed_dim, C, tubelet_size, patch_size, patch_size),
        dtype=jnp.float32) * 0.02
    bias = jax.random.normal(kb, (embed_dim,), dtype=jnp.float32) * 0.02

    # Reference: same patch extraction + plain einsum (== Conv3d with k==stride).
    patches_ref = _extract_patches(x, tubelet_size, patch_size)
    w_flat = weight.reshape(embed_dim, -1)
    ref = jnp.einsum("bnk,dk->bnd", patches_ref, w_flat) + bias[None, None, :]

    N_expected = (T // tubelet_size) * (H // patch_size) * (W // patch_size)

    # f32 path
    out = patch_embed(x, weight, bias,
                      tubelet_size=tubelet_size, patch_size=patch_size)
    out = jax.block_until_ready(out)
    assert out.shape == (B, N_expected, embed_dim)
    assert jnp.allclose(out, ref, atol=1e-4, rtol=1e-4)

    # bf16-operand path (v6e/v7x MXU optimization), f32 accumulation.
    out_bf16 = patch_embed(x, weight, bias,
                           tubelet_size=tubelet_size, patch_size=patch_size,
                           compute_dtype=jnp.bfloat16)
    out_bf16 = jax.block_until_ready(out_bf16)
    assert out_bf16.shape == (B, N_expected, embed_dim)
    assert jnp.allclose(out_bf16, ref, atol=5e-2, rtol=5e-2)

    print("KERNEL_OK")
</pallas_src>

<mosaic_0001>
module attributes {stable_mosaic.version = 11 : i64} {
  func.func @_patch_embed_kernel(%arg0: i32, %arg1: memref<16x512xf32, #tpu.memory_space<vmem>>, %arg2: memref<512x128xf32, #tpu.memory_space<vmem>>, %arg3: memref<1x128xf32, #tpu.memory_space<vmem>>, %arg4: memref<16x128xf32, #tpu.memory_space<vmem>>) attributes {dimension_semantics = [#tpu.dimension_semantics<parallel>], iteration_bounds = array<i64: 1>, scalar_prefetch = 0 : i64, scratch_operands = 0 : i64, tpu.core_type = #tpu.core_type<tc>, window_params = [{transform_indices = @transform_0, window_bounds = array<i64: 16, 512>}, {pipeline_mode = #tpu.pipeline_mode<synchronous>, transform_indices = @transform_1, window_bounds = array<i64: 512, 128>}, {pipeline_mode = #tpu.pipeline_mode<synchronous>, transform_indices = @transform_2, window_bounds = array<i64: 1, 128>}, {transform_indices = @transform_3, window_bounds = array<i64: 16, 128>}]} {
    %c0 = arith.constant 0 : index
    %c0_0 = arith.constant 0 : index
    %0 = vector.load %arg1[%c0, %c0_0] : memref<16x512xf32, #tpu.memory_space<vmem>>, vector<16x512xf32>
    %c0_1 = arith.constant 0 : index
    %c0_2 = arith.constant 0 : index
    %1 = vector.load %arg2[%c0_1, %c0_2] : memref<512x128xf32, #tpu.memory_space<vmem>>, vector<512x128xf32>
    %cst = arith.constant dense<0.000000e+00> : vector<16x128xf32>
    %2 = tpu.matmul %0, %1, %cst {dimension_numbers = #tpu.dot_dimension_numbers<[1], [0], [0], [1], [0, 0, 1, 1], [], []>} : vector<16x512xf32>, vector<512x128xf32>, vector<16x128xf32> -> vector<16x128xf32>
    %c0_3 = arith.constant 0 : index
    %c0_4 = arith.constant 0 : index
    %3 = vector.load %arg3[%c0_3, %c0_4] : memref<1x128xf32, #tpu.memory_space<vmem>>, vector<1x128xf32>
    %4 = vector.broadcast %3 : vector<1x128xf32> to vector<16x128xf32>
    %5 = arith.addf %2, %4 : vector<16x128xf32>
    %c0_5 = arith.constant 0 : index
    %c0_6 = arith.constant 0 : index
    %6 = vector.load %arg4[%c0_5, %c0_6] : memref<16x128xf32, #tpu.memory_space<vmem>>, vector<16x128xf32>
    tpu.vector_store %arg4[%c0_5, %c0_6], %5 {strides = array<i32>} : memref<16x128xf32, #tpu.memory_space<vmem>>, vector<16x128xf32>,
    return
  }
  func.func @transform_0(%arg0: i32) -> (i32, i32) {
    %c0_i32 = arith.constant 0 : i32
    %c0_i32_0 = arith.constant 0 : i32
    return %arg0, %c0_i32 : i32, i32
  }
  func.func @transform_1(%arg0: i32) -> (i32, i32) {
    %c0_i32 = arith.constant 0 : i32
    %c0_i32_0 = arith.constant 0 : i32
    %c0_i32_1 = arith.constant 0 : i32
    return %c0_i32, %c0_i32_0 : i32, i32
  }
  func.func @transform_2(%arg0: i32) -> (i32, i32) {
    %c0_i32 = arith.constant 0 : i32
    %c0_i32_0 = arith.constant 0 : i32
    %c0_i32_1 = arith.constant 0 : i32
    return %c0_i32, %c0_i32_0 : i32, i32
  }
  func.func @transform_3(%arg0: i32) -> (i32, i32) {
    %c0_i32 = arith.constant 0 : i32
    %c0_i32_0 = arith.constant 0 : i32
    return %arg0, %c0_i32 : i32, i32
  }
}

</mosaic_0001>

<llo_original>
// kernel: tpu_custom_call.1
$region0: #{tpu_custom_call.1}
  #allocation0 [shape = 'u32[]', space=smem, size = 0x4, offset = 0x4, fixed_abs, tag = 'smem constant byte address 0x4 - core index']
  #allocation1 [shape = 'u32[144,128]{1,0:T(1,128)}', space=vmem, size = 0x12000, scoped, tag = 'internal scratch']
  %s0 = inlined_call_operand.hbm [shape: f32[16,512], index: 0, kind: input, shape index: {}]
  %s1 = inlined_call_operand.hbm [shape: f32[512,128], index: 1, kind: input, shape index: {}]
  %s2 = inlined_call_operand.vmem [shape: f32[1,128], index: 2, kind: input, shape index: {}]
  %s3 = inlined_call_operand.hbm [shape: f32[16,128], index: 3, kind: output, shape index: {}]
  %s4 = sld [smem:[#allocation0]]
  $region30: #{tpu_custom_call.1} parent=0
    _
  %s6 = ssub.s32 1, %s4
  %s7 = scalar_select 0, %s6, %s4
  $region1: #{tpu_custom_call.1} parent=0
    #allocation2 [shape = 'u8[32768]{0}', space=vmem, size = 0x8000, scoped, tag = 'input window, operand 0, single buffered']
    #allocation3 [shape = 's32[1]{0}', space=sflag, size = 0x4, scoped, tag = 'scoped memory for tpu_custom_call.1']
    #allocation4 [shape = 's32[1]{0}', space=sflag, size = 0x4, scoped, tag = 'scoped memory for tpu_custom_call.1']
    #allocation5 [shape = 'u8[262144]{0}', space=vmem, size = 0x40000, scoped, tag = 'input window, operand 1, single buffered']
    #allocation6 [shape = 's32[1]{0}', space=sflag, size = 0x4, scoped, tag = 'scoped memory for tpu_custom_call.1']
    #allocation7 [shape = 'u8[8192]{0}', space=vmem, size = 0x2000, scoped, tag = 'output window, operand 0, single buffered']
    %8 = vsyncpa [#allocation3], 0
    %9 = vsyncpa [#allocation6], 0
    %10 = vsyncpa [#allocation4], 0
    // Predicated region
    $region2: #{tpu_custom_call.1} parent=1 // pred_check
      _
    $region3: #{tpu_custom_call.1} parent=1 // pred_check_branch
      %12 = sbr.rel (0) target = $region5
    $region4: #{tpu_custom_call.1} parent=1 // pred_region
      %s14 = ssub.s32 1024, 1024
      %15 = vsyncadd [#allocation3], %s14
      %s16 = sshll.u32 [#allocation2], 4
      %s17 = int_to_ptr.vmem [resolvable:$true] %s16
      %22 = dma.hbm_to_vmem [thread:$0]  %s0, 1024, %s17, [#allocation3], 512, 512, 32
    $region5: #{tpu_custom_call.1} parent=1 // pred_fallthru
      _
    // Predicated region
    $region6: #{tpu_custom_call.1} parent=1 // pred_check
      _
    $region7: #{tpu_custom_call.1} parent=1 // pred_check_branch
      %24 = sbr.rel (0) target = $region9
    $region8: #{tpu_custom_call.1} parent=1 // pred_region
      %s26 = ssub.s32 8192, 8192
      %27 = vsyncadd [#allocation6], %s26
      %s28 = sshll.u32 [#allocation5], 4
      %s29 = int_to_ptr.vmem [resolvable:$true] %s28
      %34 = dma.hbm_to_vmem [thread:$0]  %s1, 8192, %s29, [#allocation6], 128, 128, 8
    $region9: #{tpu_custom_call.1} parent=1 // pred_fallthru
      _
    // Predicated region
    $region10: #{tpu_custom_call.1} parent=1 // pred_check
      _
    $region11: #{tpu_custom_call.1} parent=1 // pred_check_branch
      %36 = sbr.rel (0) target = $region13
    $region12: #{tpu_custom_call.1} parent=1 // pred_region
      _
    $region13: #{tpu_custom_call.1} parent=1 // pred_fallthru
      _
    // Predicated region
    $region14: #{tpu_custom_call.1} parent=1 // pred_check
      _
    $region15: #{tpu_custom_call.1} parent=1 // pred_check_branch
      %38 = sbr.rel (0) target = $region17
    $region16: #{tpu_custom_call.1} parent=1 // pred_region
      %39 = dma.done [#allocation3], 1024
    $region17: #{tpu_custom_call.1} parent=1 // pred_fallthru
      _
    // Predicated region
    $region18: #{tpu_custom_call.1} parent=1 // pred_check
      _
    $region19: #{tpu_custom_call.1} parent=1 // pred_check_branch
      %41 = sbr.rel (0) target = $region21
    $region20: #{tpu_custom_call.1} parent=1 // pred_region
      %42 = dma.done [#allocation6], 8192
    $region21: #{tpu_custom_call.1} parent=1 // pred_fallthru
      _
    %v43 = vld [vmem:[#allocation2] sm:$0xff]
    %v44 = vld [vmem:[#allocation2 + $0x8] sm:$0xff]
    %v45 = vld [vmem:[#allocation2 + $0x10] sm:$0xff]
    %v46 = vld [vmem:[#allocation2 + $0x18] sm:$0xff]
    %v47 = vld [vmem:[#allocation2 + $0x20] sm:$0xff]
    %v48 = vld [vmem:[#allocation2 + $0x28] sm:$0xff]
    %v49 = vld [vmem:[#allocation2 + $0x30] sm:$0xff]
    %v50 = vld [vmem:[#allocation2 + $0x38] sm:$0xff]
    %v51 = vld [vmem:[#allocation5] sm:$0xff]
    %v52 = vld [vmem:[#allocation5 + $0x8] sm:$0xff]
    %v53 = vld [vmem:[#allocation5 + $0x10] sm:$0xff]
    %v54 = vld [vmem:[#allocation5 + $0x18] sm:$0xff]
    %v55 = vld [vmem:[#allocation5 + $0x20] sm:$0xff]
    %v56 = vld [vmem:[#allocation5 + $0x28] sm:$0xff]
    %v57 = vld [vmem:[#allocation5 + $0x30] sm:$0xff]
    %v58 = vld [vmem:[#allocation5 + $0x38] sm:$0xff]
    %v59 = vld [vmem:[#allocation5 + $0x40] sm:$0xff]
    %v60 = vld [vmem:[#allocation5 + $0x48] sm:$0xff]
    %v61 = vld [vmem:[#allocation5 + $0x50] sm:$0xff]
    %v62 = vld [vmem:[#allocation5 + $0x58] sm:$0xff]
    %v63 = vld [vmem:[#allocation5 + $0x60] sm:$0xff]
    %v64 = vld [vmem:[#allocation5 + $0x68] sm:$0xff]
    %v65 = vld [vmem:[#allocation5 + $0x70] sm:$0xff]
    %v66 = vld [vmem:[#allocation5 + $0x78] sm:$0xff]
    %v67 = vld [vmem:[#allocation5 + $0x80] sm:$0xff]
    %v68 = vld [vmem:[#allocation5 + $0x88] sm:$0xff]
    %v69 = vld [vmem:[#allocation5 + $0x90] sm:$0xff]
    %v70 = vld [vmem:[#allocation5 + $0x98] sm:$0xff]
    %v71 = vld [vmem:[#allocation5 + $0xa0] sm:$0xff]
    %v72 = vld [vmem:[#allocation5 + $0xa8] sm:$0xff]
    %v73 = vld [vmem:[#allocation5 + $0xb0] sm:$0xff]
    %v74 = vld [vmem:[#allocation5 + $0xb8] sm:$0xff]
    %v75 = vld [vmem:[#allocation5 + $0xc0] sm:$0xff]
    %v76 = vld [vmem:[#allocation5 + $0xc8] sm:$0xff]
    %v77 = vld [vmem:[#allocation5 + $0xd0] sm:$0xff]
    %v78 = vld [vmem:[#allocation5 + $0xd8] sm:$0xff]
    %v79 = vld [vmem:[#allocation5 + $0xe0] sm:$0xff]
    %v80 = vld [vmem:[#allocation5 + $0xe8] sm:$0xff]
    %v81 = vld [vmem:[#allocation5 + $0xf0] sm:$0xff]
    %v82 = vld [vmem:[#allocation5 + $0xf8] sm:$0xff]
    %v83 = vld [vmem:[#allocation5 + $0x100] sm:$0xff]
    %v84 = vld [vmem:[#allocation5 + $0x108] sm:$0xff]
    %v85 = vld [vmem:[#allocation5 + $0x110] sm:$0xff]
    %v86 = vld [vmem:[#allocation5 + $0x118] sm:$0xff]
    %v87 = vld [vmem:[#allocation5 + $0x120] sm:$0xff]
    %v88 = vld [vmem:[#allocation5 + $0x128] sm:$0xff]
    %v89 = vld [vmem:[#allocation5 + $0x130] sm:$0xff]
    %v90 = vld [vmem:[#allocation5 + $0x138] sm:$0xff]
    %v91 = vld [vmem:[#allocation5 + $0x140] sm:$0xff]
    %v92 = vld [vmem:[#allocation5 + $0x148] sm:$0xff]
    %v93 = vld [vmem:[#allocation5 + $0x150] sm:$0xff]
    %v94 = vld [vmem:[#allocation5 + $0x158] sm:$0xff]
    %v95 = vld [vmem:[#allocation5 + $0x160] sm:$0xff]
    %v96 = vld [vmem:[#allocation5 + $0x168] sm:$0xff]
    %v97 = vld [vmem:[#allocation5 + $0x170] sm:$0xff]
    %v98 = vld [vmem:[#allocation5 + $0x178] sm:$0xff]
    %v99 = vld [vmem:[#allocation5 + $0x180] sm:$0xff]
    %v100 = vld [vmem:[#allocation5 + $0x188] sm:$0xff]
    %v101 = vld [vmem:[#allocation5 + $0x190] sm:$0xff]
    %v102 = vld [vmem:[#allocation5 + $0x198] sm:$0xff]
    %v103 = vld [vmem:[#allocation5 + $0x1a0] sm:$0xff]
    %v104 = vld [vmem:[#allocation5 + $0x1a8] sm:$0xff]
    %v105 = vld [vmem:[#allocation5 + $0x1b0] sm:$0xff]
    %v106 = vld [vmem:[#allocation5 + $0x1b8] sm:$0xff]
    %v107 = vld [vmem:[#allocation5 + $0x1c0] sm:$0xff]
    %v108 = vld [vmem:[#allocation5 + $0x1c8] sm:$0xff]
    %v109 = vld [vmem:[#allocation5 + $0x1d0] sm:$0xff]
    %v110 = vld [vmem:[#allocation5 + $0x1d8] sm:$0xff]
    %v111 = vld [vmem:[#allocation5 + $0x1e0] sm:$0xff]
    %v112 = vld [vmem:[#allocation5 + $0x1e8] sm:$0xff]
    %v113 = vld [vmem:[#allocation5 + $0x1f0] sm:$0xff]
    %v114 = vld [vmem:[#allocation5 + $0x1f8] sm:$0xff]
    %v115 = vld [vmem:[%s2] sm:$0x1]
    %v117 = vlaneseq
    %v118 = vshrl.u32 %v117, 7
    %v119 = vsub.s32 0, %v118
    %v120 = vrot.slane %v115, %v119
    %122 = vmatprep.subr.mxu0 0.0
    %123 = vmatpush1.msra.mxu0 %v66
    %124 = vmatprep.subr.mxu0 0.0
    %125 = vmatpush1.msra.mxu0 %v65
    %126 = vmatprep.subr.mxu0 0.0
    %127 = vmatpush1.msra.mxu0 %v64
    %128 = vmatprep.subr.mxu0 0.0
    %129 = vmatpush1.msra.mxu0 %v63
    %130 = vmatprep.subr.mxu0 0.0
    %131 = vmatpush1.msra.mxu0 %v62
    %132 = vmatprep.subr.mxu0 0.0
    %133 = vmatpush1.msra.mxu0 %v61
    %134 = vmatprep.subr.mxu0 0.0
    %135 = vmatpush1.msra.mxu0 %v60
    %136 = vmatprep.subr.mxu0 0.0
    %137 = vmatpush1.msra.mxu0 %v59
    %138 = vmatprep.subr.mxu0 0.0
    %139 = vmatpush1.msra.mxu0 %v58
    %140 = vmatprep.subr.mxu0 0.0
    %141 = vmatpush1.msra.mxu0 %v57
    %142 = vmatprep.subr.mxu0 0.0
    %143 = vmatpush1.msra.mxu0 %v56
    %144 = vmatprep.subr.mxu0 0.0
    %145 = vmatpush1.msra.mxu0 %v55
    %146 = vmatprep.subr.mxu0 0.0
    %147 = vmatpush1.msra.mxu0 %v54
    %148 = vmatprep.subr.mxu0 0.0
    %149 = vmatpush1.msra.mxu0 %v53
    %150 = vmatprep.subr.mxu0 0.0
    %151 = vmatpush1.msra.mxu0 %v52
    %152 = vmatprep.subr.mxu0 0.0
    %153 = vmatpush1.msra.mxu0 %v51
    %154 = vmatprep.subr.mxu0 0.0
    %155 = vmatpush2.msra.mxu0 %v82
    %156 = vmatprep.subr.mxu0 0.0
    %157 = vmatpush2.msra.mxu0 %v81
    %158 = vmatprep.subr.mxu0 0.0
    %159 = vmatpush2.msra.mxu0 %v80
    %160 = vmatprep.subr.mxu0 0.0
    %161 = vmatpush2.msra.mxu0 %v79
    %162 = vmatprep.subr.mxu0 0.0
    %163 = vmatpush2.msra.mxu0 %v78
    %164 = vmatprep.subr.mxu0 0.0
    %165 = vmatpush2.msra.mxu0 %v77
    %166 = vmatprep.subr.mxu0 0.0
    %167 = vmatpush2.msra.mxu0 %v76
    %168 = vmatprep.subr.mxu0 0.0
    %169 = vmatpush2.msra.mxu0 %v75
    %170 = vmatprep.subr.mxu0 0.0
    %171 = vmatpush2.msra.mxu0 %v74
    %172 = vmatprep.subr.mxu0 0.0
    %173 = vmatpush2.msra.mxu0 %v73
    %174 = vmatprep.subr.mxu0 0.0
    %175 = vmatpush2.msra.mxu0 %v72
    %176 = vmatprep.subr.mxu0 0.0
    %177 = vmatpush2.msra.mxu0 %v71
    %178 = vmatprep.subr.mxu0 0.0
    %179 = vmatpush2.msra.mxu0 %v70
    %180 = vmatprep.subr.mxu0 0.0
    %181 = vmatpush2.msra.mxu0 %v69
    %182 = vmatprep.subr.mxu0 0.0
    %183 = vmatpush2.msra.mxu0 %v68
    %184 = vmatprep.subr.mxu0 0.0
    %185 = vmatpush2.msra.mxu0 %v67
    %186 = vmatprep.mubr.f32.mxu0 %v44
    %187 = vmatmul.mubr.f32.gmra.mxu0 %v43
    %v188 = vpop.f32.mrf.mxu0
    %v189 = vadd.f32 %v120, %v188
    %v190 = vpop.f32.mrf.mxu0
    %191 = vmatprep.mubr.f32.mxu0 %v48
    %192 = vmatmul.mubr.f32.gmra.mxu0 %v47
    %v193 = vpop.f32.mrf.mxu0
    %v194 = vadd.f32 %v120, %v193
    %v195 = vpop.f32.mrf.mxu0
    %196 = vdwg.mxu0
    %197 = vmatprep.subr.mxu0 0.0
    %198 = vmatpush1.msra.mxu0 %v98
    %199 = vmatprep.subr.mxu0 0.0
    %200 = vmatpush1.msra.mxu0 %v97
    %201 = vmatprep.subr.mxu0 0.0
    %202 = vmatpush1.msra.mxu0 %v96
    %203 = vmatprep.subr.mxu0 0.0
    %204 = vmatpush1.msra.mxu0 %v95
    %205 = vmatprep.subr.mxu0 0.0
    %206 = vmatpush1.msra.mxu0 %v94
    %207 = vmatprep.subr.mxu0 0.0
    %208 = vmatpush1.msra.mxu0 %v93
    %209 = vmatprep.subr.mxu0 0.0
    %210 = vmatpush1.msra.mxu0 %v92
    %211 = vmatprep.subr.mxu0 0.0
    %212 = vmatpush1.msra.mxu0 %v91
    %213 = vmatprep.subr.mxu0 0.0
    %214 = vmatpush1.msra.mxu0 %v90
    %215 = vmatprep.subr.mxu0 0.0
    %216 = vmatpush1.msra.mxu0 %v89
    %217 = vmatprep.subr.mxu0 0.0
    %218 = vmatpush1.msra.mxu0 %v88
    %219 = vmatprep.subr.mxu0 0.0
    %220 = vmatpush1.msra.mxu0 %v87
    %221 = vmatprep.subr.mxu0 0.0
    %222 = vmatpush1.msra.mxu0 %v86
    %223 = vmatprep.subr.mxu0 0.0
    %224 = vmatpush1.msra.mxu0 %v85
    %225 = vmatprep.subr.mxu0 0.0
    %226 = vmatpush1.msra.mxu0 %v84
    %227 = vmatprep.subr.mxu0 0.0
    %228 = vmatpush1.msra.mxu0 %v83
    %229 = vmatprep.subr.mxu0 0.0
    %230 = vmatpush2.msra.mxu0 %v114
    %231 = vmatprep.subr.mxu0 0.0
    %232 = vmatpush2.msra.mxu0 %v113
    %233 = vmatprep.subr.mxu0 0.0
    %234 = vmatpush2.msra.mxu0 %v112
    %235 = vmatprep.subr.mxu0 0.0
    %236 = vmatpush2.msra.mxu0 %v111
    %237 = vmatprep.subr.mxu0 0.0
    %238 = vmatpush2.msra.mxu0 %v110
    %239 = vmatprep.subr.mxu0 0.0
    %240 = vmatpush2.msra.mxu0 %v109
    %241 = vmatprep.subr.mxu0 0.0
    %242 = vmatpush2.msra.mxu0 %v108
    %243 = vmatprep.subr.mxu0 0.0
    %244 = vmatpush2.msra.mxu0 %v107
    %245 = vmatprep.subr.mxu0 0.0
    %246 = vmatpush2.msra.mxu0 %v106
    %247 = vmatprep.subr.mxu0 0.0
    %248 = vmatpush2.msra.mxu0 %v105
    %249 = vmatprep.subr.mxu0 0.0
    %250 = vmatpush2.msra.mxu0 %v104
    %251 = vmatprep.subr.mxu0 0.0
    %252 = vmatpush2.msra.mxu0 %v103
    %253 = vmatprep.subr.mxu0 0.0
    %254 = vmatpush2.msra.mxu0 %v102
    %255 = vmatprep.subr.mxu0 0.0
    %256 = vmatpush2.msra.mxu0 %v101
    %257 = vmatprep.subr.mxu0 0.0
    %258 = vmatpush2.msra.mxu0 %v100
    %259 = vmatprep.subr.mxu0 0.0
    %260 = vmatpush2.msra.mxu0 %v99
    %261 = vmatprep.mubr.f32.mxu0 %v46
    %262 = vmatmul.mubr.f32.gmra.mxu0 %v45
    %v263 = vpop.f32.mrf.mxu0
    %v264 = vadd.f32 %v189, %v263
    %v265 = vpop.f32.mrf.mxu0
    %266 = vmatprep.mubr.f32.mxu0 %v50
    %267 = vmatmul.mubr.f32.gmra.mxu0 %v49
    %v268 = vpop.f32.mrf.mxu0
    %v269 = vadd.f32 %v194, %v268
    %v270 = vpop.f32.mrf.mxu0
    %271 = vdwg.mxu0
    %272 = vst [vmem:[#allocation7] sm:$0xff] %v264
    %273 = vst [vmem:[#allocation7 + $0x8] sm:$0xff] %v269
    // Predicated region
    $region22: #{tpu_custom_call.1} parent=1 // pred_check
      _
    $region23: #{tpu_custom_call.1} parent=1 // pred_check_branch
      %275 = sbr.rel (0) target = $region25
    $region24: #{tpu_custom_call.1} parent=1 // pred_region
      %s277 = ssub.s32 256, 256
      %278 = vsyncadd [#allocation4], %s277
      %s279 = sshll.u32 [#allocation7], 4
      %s280 = int_to_ptr.vmem [resolvable:$true] %s279
      %285 = dma.vmem_to_hbm [thread:$0]  %s280, 256, %s3, [#allocation4], 128, 128, 8
    $region25: #{tpu_custom_call.1} parent=1 // pred_fallthru
      _
    // Predicated region
    $region26: #{tpu_custom_call.1} parent=1 // pred_check
      _
    $region27: #{tpu_custom_call.1} parent=1 // pred_check_branch
      %287 = sbr.rel (0) target = $region29
    $region28: #{tpu_custom_call.1} parent=1 // pred_region
      %288 = dma.done [#allocation4], 256
    $region29: #{tpu_custom_call.1} parent=1 // pred_fallthru
      _
    %289 = vsyncpa [#allocation3], 1
    %290 = vsyncpa [#allocation6], 1
    %291 = vsyncpa [#allocation4], 1

</llo_original>
